<compile_context>
chip_gen: v5e
topology: v5e:2x2
jax: 0.10.0
libtpu: 0.0.40
codegen_flags: <defaults>
</compile_context>

<pallas_src>
import functools
import math

import jax
import jax.numpy as jnp
from jax.experimental import pallas as pl
from jax.experimental.pallas import tpu as pltpu


_LANE = 128
_TARGET_BLOCK_BYTES = 2 * 1024 * 1024   # f32-promoted logits per block (v7x-safe)
_MIN_BLOCKS_PER_IMAGE = 8               # keep DMA pipeline in steady state / megacore balance
_ROW_ALIGN = 32                         # second-minor block dim alignment (covers f32/bf16/int8 packing)


def _pick_rows(r_total, c):
    """Rows (of 128 pixels) per block for the aligned pixel-major 3-D layout."""
    if r_total <= 2 * _ROW_ALIGN:
        return r_total                  # tiny image: one block (full-dim escape hatch)
    bytes_per_row = c * 4 * _LANE       # budget at f32: inputs are promoted in-kernel
    target = max(_ROW_ALIGN,
                 _TARGET_BLOCK_BYTES // bytes_per_row // _ROW_ALIGN * _ROW_ALIGN)
    cap = max(_ROW_ALIGN,
              r_total // _MIN_BLOCKS_PER_IMAGE // _ROW_ALIGN * _ROW_ALIGN)
    return min(target, cap)


def _pick_lanes(hw, c):
    """Pixels per block (lane axis) for the ragged 2-D fallback layout."""
    if hw <= 8 * _LANE:
        return hw                       # tiny extent: single full-width block
    bytes_per_px = c * 4                # budget at f32
    target = max(8 * _LANE, _TARGET_BLOCK_BYTES // bytes_per_px // _LANE * _LANE)
    cap = max(8 * _LANE, hw // _MIN_BLOCKS_PER_IMAGE // _LANE * _LANE)
    return min(target, cap, hw // _LANE * _LANE)


def _partial_loss(x_ref, t_ref, prog_p, *, hw, need_mask):
    """Shared per-tile math.  Works for both layouts:

      3-D: x (C, R, 128), t (1, R, 128)  -- classes on the leading axis;
           class reductions are elementwise VPU over fully packed vregs.
      2-D: x (C, TM),     t (1, TM)      -- ragged-HW fallback, classes on sublanes.

    Per-pixel loss = lse_shift - z_t (the row max cancels).  Returns
    (lse_shift, z_t, hit, valid); `valid` is None when no masking is needed.
    """
    x = x_ref[...]                                   # raw input dtype, no sanitize pass
    pix = x.shape[1:]

    # Row max + shift in the input dtype; upcast once for exp/log
    # (cheap for bf16 inputs, a no-op for f32).
    m = jnp.max(x, axis=0, keepdims=True)            # (1, *pix)
    z = (x - m).astype(jnp.float32)                  # (C, *pix) f32
    lse_shift = jnp.log(jnp.sum(jnp.exp(z), axis=0, keepdims=True))   # (1, *pix)

    # Target-class logit via constant class-index compare + select
    # (no f32 one-hot materialization).
    cls = jnp.arange(x.shape[0], dtype=jnp.int32).reshape((x.shape[0],) + (1,) * len(pix))
    hit = cls == t_ref[...].astype(jnp.int32)        # (C, *pix) bool
    z_t = jnp.sum(jnp.where(hit, z, 0.0), axis=0, keepdims=True)      # (1, *pix)

    if need_mask:
        # Only the last block of each image has pixels past HW; any garbage
        # there stays confined per-lane (per-lane max / select) and is masked
        # out of the (1, *pix) results -- never a full-tile sanitize.
        shape = (1,) + tuple(pix)
        flat = None
        stride = 1
        for ax in range(len(shape) - 1, 0, -1):
            term = jax.lax.broadcasted_iota(jnp.int32, shape, ax) * stride
            flat = term if flat is None else flat + term
            stride *= shape[ax]
        valid = (prog_p * math.prod(pix) + flat) < hw
    else:
        valid = None
    return lse_shift, z_t, hit, valid


def _ce2d_kernel(x_ref, t_ref, out_ref, *, hw, need_mask):
    """Unweighted path: one lane-dense (1,128) partial loss-sum block per step."""
    lse, z_t, _, valid = _partial_loss(x_ref, t_ref, pl.program_id(1),
                                       hw=hw, need_mask=need_mask)
    loss = lse - z_t
    if need_mask:
        loss = jnp.where(valid, loss, 0.0)
    out_ref[...] = jnp.full(out_ref.shape, jnp.sum(loss), dtype=jnp.float32)


def _ce2d_kernel_weighted(x_ref, t_ref, w_ref, num_ref, den_ref, *, hw, need_mask):
    """Weighted path: also emits the per-tile sum of target-class weights."""
    lse, z_t, hit, valid = _partial_loss(x_ref, t_ref, pl.program_id(1),
                                         hw=hw, need_mask=need_mask)
    w = w_ref[...].astype(jnp.float32)               # (C, 1[, 1]) resident
    w_t = jnp.sum(jnp.where(hit, w, 0.0), axis=0, keepdims=True)
    loss = lse - z_t
    if need_mask:
        loss = jnp.where(valid, loss, 0.0)
        w_t = jnp.where(valid, w_t, 0.0)
    num_ref[...] = jnp.full(num_ref.shape, jnp.sum(w_t * loss), dtype=jnp.float32)
    den_ref[...] = jnp.full(den_ref.shape, jnp.sum(w_t), dtype=jnp.float32)


@jax.jit
def cross_entropy_loss_2d(outputs, targets, weight=None):
    """JAX/Pallas equivalent of CrossEntropyLoss2d(weight).forward(outputs, targets).

    outputs: (N, C, H, W) logits; targets: (N, 1, H, W) integer class indices
    (uint8/int16/int32 all consumed natively -- store labels narrow to cut
    HBM traffic).
    """
    N, C, H, W = outputs.shape
    HW = H * W

    # Keep narrow integer label dtypes as-is; only widen unsupported dtypes.
    if not (jnp.issubdtype(targets.dtype, jnp.integer) and targets.dtype.itemsize <= 4):
        targets = targets.astype(jnp.int32)

    aligned = (HW % _LANE == 0) and (HW >= _LANE)
    if aligned:
        # Pixel-major 3-D layout (free reshape): 100% vreg occupancy for any C.
        r_total = HW // _LANE
        rows = _pick_rows(r_total, C)
        P = pl.cdiv(r_total, rows)
        block_px = rows * _LANE
        x = outputs.reshape(N, C, r_total, _LANE)
        t = targets.reshape(N, 1, r_total, _LANE)
        x_spec = pl.BlockSpec((None, C, rows, _LANE), lambda n, p: (n, 0, p, 0))
        t_spec = pl.BlockSpec((None, 1, rows, _LANE), lambda n, p: (n, 0, p, 0))
        w_shape = (C, 1, 1)
        w_spec = pl.BlockSpec(w_shape, lambda n, p: (0, 0, 0))
    else:
        # Ragged HW: masked 2-D layout (padding HW up to 128 would force a full
        # copy of the logits -- 3x the HBM traffic of this single-pass read).
        tm = _pick_lanes(HW, C)
        P = pl.cdiv(HW, tm)
        block_px = tm
        x = outputs.reshape(N, C, HW)
        t = targets.reshape(N, 1, HW)
        x_spec = pl.BlockSpec((None, C, tm), lambda n, p: (n, 0, p))
        t_spec = pl.BlockSpec((None, 1, tm), lambda n, p: (n, 0, p))
        w_shape = (C, 1)
        w_spec = pl.BlockSpec(w_shape, lambda n, p: (0, 0))

    need_mask = (P * block_px) != HW

    # One lane-dense (1,128) partial-sum block per (image, pixel-tile) step:
    # fully parallel grid, tiny final reduction in the JAX epilogue.
    part_shape = jax.ShapeDtypeStruct((N, P, 1, _LANE), jnp.float32)
    part_spec = pl.BlockSpec((None, None, 1, _LANE), lambda n, p: (n, p, 0, 0))
    cparams = pltpu.CompilerParams(
        dimension_semantics=("parallel", "parallel"),
        # ~2 MiB f32 logits/block + double-buffered inputs + f32 temporaries
        # stay well under 32 MiB: safe on v5e/v6e (128 MiB VMEM) and leaves
        # headroom on v7x (64 MiB).
        vmem_limit_bytes=32 * 1024 * 1024,
    )

    if weight is None:
        partial = pl.pallas_call(
            functools.partial(_ce2d_kernel, hw=HW, need_mask=need_mask),
            out_shape=part_shape,
            grid=(N, P),
            in_specs=[x_spec, t_spec],
            out_specs=part_spec,
            compiler_params=cparams,
        )(x, t)
        return jnp.sum(partial[:, :, 0, 0]) / jnp.float32(N * HW)

    w = jnp.asarray(weight, jnp.float32).reshape(w_shape)
    num, den = pl.pallas_call(
        functools.partial(_ce2d_kernel_weighted, hw=HW, need_mask=need_mask),
        out_shape=(part_shape, part_shape),
        grid=(N, P),
        in_specs=[x_spec, t_spec, w_spec],
        out_specs=(part_spec, part_spec),
        compiler_params=cparams,
    )(x, t, w)
    # NOTE: if the total target-class weight is zero this is NaN (matches PyTorch).
    return jnp.sum(num[:, :, 0, 0]) / jnp.sum(den[:, :, 0, 0])


def _reference(outputs, targets, weight=None):
    """Pure-JAX reference of the PyTorch forward."""
    logp = jax.nn.log_softmax(outputs.astype(jnp.float32), axis=1)   # (N,C,H,W)
    t = targets[:, 0, :, :].astype(jnp.int32)                        # (N,H,W)
    picked = jnp.take_along_axis(logp, t[:, None, :, :], axis=1)[:, 0]
    if weight is None:
        return -jnp.mean(picked)
    w_t = jnp.asarray(weight, jnp.float32)[t]
    return -jnp.sum(w_t * picked) / jnp.sum(w_t)


if __name__ == "__main__":
    key = jax.random.PRNGKey(0)
    k1, k2, k3, k4, k5, k6 = jax.random.split(key, 6)

    # 1) aligned spatial extent (HW % 128 == 0): pixel-major 3-D path, int32 labels
    N, C, H, W = 2, 4, 16, 16
    outputs = jax.random.normal(k1, (N, C, H, W), dtype=jnp.float32)
    targets = jax.random.randint(k2, (N, 1, H, W), 0, C, dtype=jnp.int32)
    loss = jax.block_until_ready(cross_entropy_loss_2d(outputs, targets))
    ref = _reference(outputs, targets)
    assert jnp.allclose(loss, ref, rtol=1e-5, atol=1e-5), (loss, ref)

    # 1b) same data, int16 labels (narrow-label fast path on the 3-D layout)
    loss1b = jax.block_until_ready(
        cross_entropy_loss_2d(outputs, targets.astype(jnp.int16)))
    assert jnp.allclose(loss1b, ref, rtol=1e-5, atol=1e-5), (loss1b, ref)

    # 2) ragged spatial extent (13*17 = 221): 2-D fallback, single block, int16 labels
    H2, W2 = 13, 17
    out2 = jax.random.normal(k3, (N, C, H2, W2), dtype=jnp.float32)
    tgt2 = jax.random.randint(k4, (N, 1, H2, W2), 0, C, dtype=jnp.int32).astype(jnp.int16)
    loss2 = jax.block_until_ready(cross_entropy_loss_2d(out2, tgt2))
    ref2 = _reference(out2, tgt2)
    assert jnp.allclose(loss2, ref2, rtol=1e-5, atol=1e-5), (loss2, ref2)

    # 2b) ragged multi-tile extent (40*40 = 1600): exercises the masked partial block
    H3, W3 = 40, 40
    out3 = jax.random.normal(k5, (N, C, H3, W3), dtype=jnp.float32)
    tgt3 = jax.random.randint(k6, (N, 1, H3, W3), 0, C, dtype=jnp.int32)
    loss2b = jax.block_until_ready(cross_entropy_loss_2d(out3, tgt3))
    ref2b = _reference(out3, tgt3)
    assert jnp.allclose(loss2b, ref2b, rtol=1e-5, atol=1e-5), (loss2b, ref2b)

    # 3) weighted path, aligned layout
    wvec = jax.random.uniform(k5, (C,), dtype=jnp.float32) + 0.5
    loss3 = jax.block_until_ready(cross_entropy_loss_2d(outputs, targets, wvec))
    ref3 = _reference(outputs, targets, wvec)
    assert jnp.allclose(loss3, ref3, rtol=1e-5, atol=1e-5), (loss3, ref3)

    # 4) weighted path, ragged layout, int16 labels
    loss4 = jax.block_until_ready(cross_entropy_loss_2d(out2, tgt2, wvec))
    ref4 = _reference(out2, tgt2, wvec)
    assert jnp.allclose(loss4, ref4, rtol=1e-5, atol=1e-5), (loss4, ref4)

    print("KERNEL_OK")
</pallas_src>

<mosaic_0001>
module attributes {stable_mosaic.version = 11 : i64} {
  func.func @_ce2d_kernel(%arg0: i32, %arg1: i32, %arg2: memref<1x4x2x128xf32, #tpu.memory_space<vmem>>, %arg3: memref<1x1x2x128xi32, #tpu.memory_space<vmem>>, %arg4: memref<1x1x1x128xf32, #tpu.memory_space<vmem>>) attributes {dimension_semantics = [#tpu.dimension_semantics<parallel>, #tpu.dimension_semantics<parallel>], iteration_bounds = array<i64: 2, 1>, scalar_prefetch = 0 : i64, scratch_operands = 0 : i64, tpu.core_type = #tpu.core_type<tc>, window_params = [{transform_indices = @transform_0, window_bounds = array<i64: 1, 4, 2, 128>}, {transform_indices = @transform_1, window_bounds = array<i64: 1, 1, 2, 128>}, {transform_indices = @transform_2, window_bounds = array<i64: 1, 1, 1, 128>}]} {
    %c0 = arith.constant 0 : index
    %c0_0 = arith.constant 0 : index
    %c0_1 = arith.constant 0 : index
    %c0_2 = arith.constant 0 : index
    %0 = vector.load %arg2[%c0, %c0_0, %c0_1, %c0_2] : memref<1x4x2x128xf32, #tpu.memory_space<vmem>>, vector<1x4x2x128xf32>
    %1 = vector.shape_cast %0 : vector<1x4x2x128xf32> to vector<4x2x128xf32>
    %cst = arith.constant dense<0xFF800000> : vector<2x128xf32>
    %2 = vector.multi_reduction <maximumf>, %1, %cst [0] : vector<4x2x128xf32> to vector<2x128xf32>
    %3 = vector.shape_cast %2 : vector<2x128xf32> to vector<1x2x128xf32>
    %4 = vector.broadcast %3 : vector<1x2x128xf32> to vector<4x2x128xf32>
    %5 = arith.subf %1, %4 : vector<4x2x128xf32>
    %6 = math.exp %5 : vector<4x2x128xf32>
    %cst_3 = arith.constant dense<0.000000e+00> : vector<2x128xf32>
    %7 = vector.multi_reduction <add>, %6, %cst_3 [0] : vector<4x2x128xf32> to vector<2x128xf32>
    %8 = vector.shape_cast %7 : vector<2x128xf32> to vector<1x2x128xf32>
    %9 = math.log %8 : vector<1x2x128xf32>
    %10 = tpu.iota {dimensions = array<i32: 1>} : vector<1x4xi32>
    %11 = vector.shape_cast %10 : vector<1x4xi32> to vector<4xi32>
    %12 = vector.shape_cast %11 : vector<4xi32> to vector<4x1x1xi32>
    %c0_4 = arith.constant 0 : index
    %c0_5 = arith.constant 0 : index
    %c0_6 = arith.constant 0 : index
    %c0_7 = arith.constant 0 : index
    %13 = vector.load %arg3[%c0_4, %c0_5, %c0_6, %c0_7] : memref<1x1x2x128xi32, #tpu.memory_space<vmem>>, vector<1x1x2x128xi32>
    %14 = vector.shape_cast %13 : vector<1x1x2x128xi32> to vector<1x2x128xi32>
    %15 = vector.broadcast %12 : vector<4x1x1xi32> to vector<4x2x128xi32>
    %16 = vector.broadcast %14 : vector<1x2x128xi32> to vector<4x2x128xi32>
    %17 = arith.cmpi eq, %15, %16 : vector<4x2x128xi32>
    %cst_8 = arith.constant 0.000000e+00 : f32
    %18 = vector.broadcast %cst_8 : f32 to vector<4x2x128xf32>
    %19 = arith.select %17, %5, %18 : vector<4x2x128xi1>, vector<4x2x128xf32>
    %cst_9 = arith.constant dense<0.000000e+00> : vector<2x128xf32>
    %20 = vector.multi_reduction <add>, %19, %cst_9 [0] : vector<4x2x128xf32> to vector<2x128xf32>
    %21 = vector.shape_cast %20 : vector<2x128xf32> to vector<1x2x128xf32>
    %22 = arith.subf %9, %21 : vector<1x2x128xf32>
    %23 = vector.shape_cast %22 : vector<1x2x128xf32> to vector<1x1x2x128xf32>
    %cst_10 = arith.constant dense<0.000000e+00> : vector<1xf32>
    %24 = vector.multi_reduction <add>, %23, %cst_10 [1, 2, 3] : vector<1x1x2x128xf32> to vector<1xf32>
    %25 = vector.shape_cast %24 : vector<1xf32> to vector<1x1x1x1xf32>
    %26 = vector.extract %25[0, 0, 0, 0] : f32 from vector<1x1x1x1xf32>
    %27 = vector.broadcast %26 : f32 to vector<1x128xf32>
    %c0_11 = arith.constant 0 : index
    %c0_12 = arith.constant 0 : index
    %c0_13 = arith.constant 0 : index
    %c0_14 = arith.constant 0 : index
    %28 = vector.load %arg4[%c0_11, %c0_12, %c0_13, %c0_14] : memref<1x1x1x128xf32, #tpu.memory_space<vmem>>, vector<1x1x1x128xf32>
    %29 = vector.shape_cast %28 : vector<1x1x1x128xf32> to vector<1x128xf32>
    %30 = vector.shape_cast %27 : vector<1x128xf32> to vector<1x1x1x128xf32>
    tpu.vector_store %arg4[%c0_11, %c0_12, %c0_13, %c0_14], %30 {strides = array<i32>} : memref<1x1x1x128xf32, #tpu.memory_space<vmem>>, vector<1x1x1x128xf32>,
    return
  }
  func.func @transform_0(%arg0: i32, %arg1: i32) -> (i32, i32, i32, i32) {
    %c0_i32 = arith.constant 0 : i32
    %c0_i32_0 = arith.constant 0 : i32
    %c0_i32_1 = arith.constant 0 : i32
    return %arg0, %c0_i32, %arg1, %c0_i32_0 : i32, i32, i32, i32
  }
  func.func @transform_1(%arg0: i32, %arg1: i32) -> (i32, i32, i32, i32) {
    %c0_i32 = arith.constant 0 : i32
    %c0_i32_0 = arith.constant 0 : i32
    %c0_i32_1 = arith.constant 0 : i32
    return %arg0, %c0_i32, %arg1, %c0_i32_0 : i32, i32, i32, i32
  }
  func.func @transform_2(%arg0: i32, %arg1: i32) -> (i32, i32, i32, i32) {
    %c0_i32 = arith.constant 0 : i32
    %c0_i32_0 = arith.constant 0 : i32
    %c0_i32_1 = arith.constant 0 : i32
    return %arg0, %arg1, %c0_i32, %c0_i32_0 : i32, i32, i32, i32
  }
}

</mosaic_0001>

<llo_original>
// kernel: cross_entropy_loss_2d.1
$region0: #{cross_entropy_loss_2d.1}
  #allocation0 [shape = 'u32[]', space=smem, size = 0x4, offset = 0x4, fixed_abs, tag = 'smem constant byte address 0x4 - core index']
  #allocation1 [shape = 'u32[72,128]{1,0:T(1,128)}', space=vmem, size = 0x9000, scoped, tag = 'internal scratch']
  %s0 = inlined_call_operand.vmem [shape: f32[2,4,2,128], index: 0, kind: input, shape index: {}]
  %s1 = inlined_call_operand.vmem [shape: s32[2,1,2,128], index: 1, kind: input, shape index: {}]
  %s2 = inlined_call_operand.vmem [shape: f32[2,1,1,128], index: 2, kind: output, shape index: {}]
  %s3 = sld [smem:[#allocation0]]
  $region41: #{cross_entropy_loss_2d.1} parent=0
    _
  %s5 = ssub.s32 1, %s3
  %s6 = scalar_select 0, %s5, %s3
  loop: start=0, step=1, limit=4
  $region2: #{cross_entropy_loss_2d.1} parent=0 // loop_pre_header
    _
  $region3: #{cross_entropy_loss_2d.1} parent=0 // loop_header
    %s8 = sphi 0, %s12
    %p9 = scmp.ge.s32.totalorder %s8, 4
    %s15 = sphi 0, %s27
    %s16 = sphi 0, %s23
    %s17 = sphi 0, %s15
    %s18 = sphi 0, %s16
    %s19 = sphi 0, %s17
    %s20 = sphi 0, %s18
    %s32 = sphi 0, %s34
    %s35 = sphi 0, %s32
    %s36 = sphi 0, %s35
    %s52 = sphi 0, %s36
    %s60 = sphi 0, %s62
    %s63 = sphi 0, %s60
    %s64 = sphi 0, %s63
    %s80 = sphi 0, %s64
    %s88 = sphi 0, %s90
    %s91 = sphi 0, %s88
    %s92 = sphi 0, %s91
    %s108 = sphi 0, %s92
  $region4: #{cross_entropy_loss_2d.1} parent=0 // loop_header_branch
    %11 = sbr.rel (%p9) target = $region8
  $region5: #{cross_entropy_loss_2d.1} parent=0 // loop_body
    %s13 = ssub.s32 %s8, 1
    %s14 = ssub.s32 %s8, 2
    %s21 = sadd.s32 1, %s16
    %p22 = scmp.ge.s32.totalorder %s21, 1
    %s23 = scalar_select %p22, 0, %s21
    %s24 = sadd.s32 1, %s15
    %s25 = scalar_select %p22, %s24, %s15
    %p26 = scmp.ge.s32.totalorder %s25, 2
    %s27 = scalar_select %p26, 0, %s25
    %s28 = ssub.s32 %s15, %s27
    %s29 = ssub.s32 %s16, %s23
    %s30 = sor.u32 %s28, %s29
    %p31 = scmp.eq.s32.totalorder %s30, 0
    %s33 = sadd.s32 %s32, 1
    %s34 = scalar_select %p31, %s32, %s33
    %p37 = pneg %p31
    %p38 = scmp.eq.s32.totalorder %s8, 1
    %p39 = por %p37, %p38
    %p40 = scmp.ne.s32.totalorder %s32, %s35
    %p41 = scmp.eq.s32.totalorder %s8, 0
    %p42 = por %p40, %p41
    %p43 = scmp.ne.s32.totalorder %s32, %s35
    %p44 = scmp.eq.s32.totalorder %s13, 1
    %p45 = por %p43, %p44
    %p46 = scmp.ne.s32.totalorder %s35, %s36
    %p47 = scmp.eq.s32.totalorder %s13, 0
    %p48 = por %p46, %p47
    %p49 = scmp.ne.s32.totalorder %s35, %s36
    %p50 = scmp.eq.s32.totalorder %s14, 1
    %p51 = por %p49, %p50
    %p53 = scmp.ne.s32.totalorder %s36, %s52
    %p54 = scmp.eq.s32.totalorder %s14, 0
    %p55 = por %p53, %p54
    %s56 = ssub.s32 %s15, %s27
    %s57 = ssub.s32 %s16, %s23
    %s58 = sor.u32 %s56, %s57
    %p59 = scmp.eq.s32.totalorder %s58, 0
    %s61 = sadd.s32 %s60, 1
    %s62 = scalar_select %p59, %s60, %s61
    %p65 = pneg %p59
    %p66 = scmp.eq.s32.totalorder %s8, 1
    %p67 = por %p65, %p66
    %p68 = scmp.ne.s32.totalorder %s60, %s63
    %p69 = scmp.eq.s32.totalorder %s8, 0
    %p70 = por %p68, %p69
    %p71 = scmp.ne.s32.totalorder %s60, %s63
    %p72 = scmp.eq.s32.totalorder %s13, 1
    %p73 = por %p71, %p72
    %p74 = scmp.ne.s32.totalorder %s63, %s64
    %p75 = scmp.eq.s32.totalorder %s13, 0
    %p76 = por %p74, %p75
    %p77 = scmp.ne.s32.totalorder %s63, %s64
    %p78 = scmp.eq.s32.totalorder %s14, 1
    %p79 = por %p77, %p78
    %p81 = scmp.ne.s32.totalorder %s64, %s80
    %p82 = scmp.eq.s32.totalorder %s14, 0
    %p83 = por %p81, %p82
    %s84 = ssub.s32 %s15, %s27
    %s85 = ssub.s32 %s16, %s23
    %s86 = sor.u32 %s84, %s85
    %p87 = scmp.eq.s32.totalorder %s86, 0
    %s89 = sadd.s32 %s88, 1
    %s90 = scalar_select %p87, %s88, %s89
    %p93 = pneg %p87
    %p94 = scmp.eq.s32.totalorder %s8, 1
    %p95 = por %p93, %p94
    %p96 = scmp.ne.s32.totalorder %s88, %s91
    %p97 = scmp.eq.s32.totalorder %s8, 0
    %p98 = por %p96, %p97
    %p99 = scmp.ne.s32.totalorder %s88, %s91
    %p100 = scmp.eq.s32.totalorder %s13, 1
    %p101 = por %p99, %p100
    %p102 = scmp.ne.s32.totalorder %s91, %s92
    %p103 = scmp.eq.s32.totalorder %s13, 0
    %p104 = por %p102, %p103
    %p105 = scmp.ne.s32.totalorder %s91, %s92
    %p106 = scmp.eq.s32.totalorder %s14, 1
    %p107 = por %p105, %p106
    %p109 = scmp.ne.s32.totalorder %s92, %s108
    %p110 = scmp.eq.s32.totalorder %s14, 0
    %p111 = por %p109, %p110
    %p112 = scmp.le.s32.totalorder 1, %s8
    %p113 = scmp.lt.s32.totalorder %s8, 3
    %p114 = pnand %p112, %p113
    %p115 = pneg %p114
    // Predicated region
    $region9: #{cross_entropy_loss_2d.1} parent=5 // pred_check
      _
    $region10: #{cross_entropy_loss_2d.1} parent=5 // pred_check_branch
      %117 = sbr.rel (%p114) target = $region12
    $region11: #{cross_entropy_loss_2d.1} parent=5 // pred_region
      %s118 = ssub.s32 %s8, 1
    $region12: #{cross_entropy_loss_2d.1} parent=5 // pred_fallthru
      _
    %p119 = scmp.lt.s32.totalorder %s8, 2
    // Predicated region
    $region13: #{cross_entropy_loss_2d.1} parent=5 // pred_check
      %p120 = pneg %p119
    $region14: #{cross_entropy_loss_2d.1} parent=5 // pred_check_branch
      %122 = sbr.rel (%p120) target = $region16
    $region15: #{cross_entropy_loss_2d.1} parent=5 // pred_region
      // Predicated region
      $region17: #{cross_entropy_loss_2d.1} parent=15 // pred_check
        %p123 = pneg %p42
      $region18: #{cross_entropy_loss_2d.1} parent=15 // pred_check_branch
        %125 = sbr.rel (%p123) target = $region20
      $region19: #{cross_entropy_loss_2d.1} parent=15 // pred_region
        %p126 = scmp.lt.s32.totalorder %s15, 1
        %s127 = scalar_select %p126, %s15, 1
        %p128 = scmp.lt.s32.totalorder %s16, 0
        %s129 = scalar_select %p128, %s16, 0
        %s130 = smul.addr %s127, 4
        %s131 = sadd.s32 %s129, %s130
        %s132 = smul.addr %s131, 2
        %s133 = scalar_lea.vmem %s0, %s132
      $region20: #{cross_entropy_loss_2d.1} parent=15 // pred_fallthru
        _
      // Predicated region
      $region21: #{cross_entropy_loss_2d.1} parent=15 // pred_check
        %p134 = pneg %p70
      $region22: #{cross_entropy_loss_2d.1} parent=15 // pred_check_branch
        %136 = sbr.rel (%p134) target = $region24
      $region23: #{cross_entropy_loss_2d.1} parent=15 // pred_region
        %p137 = scmp.lt.s32.totalorder %s15, 1
        %s138 = scalar_select %p137, %s15, 1
        %p139 = scmp.lt.s32.totalorder %s16, 0
        %s140 = scalar_select %p139, %s16, 0
        %s141 = sadd.s32 %s140, %s138
        %s142 = smul.addr %s141, 2
        %s143 = scalar_lea.vmem %s1, %s142
      $region24: #{cross_entropy_loss_2d.1} parent=15 // pred_fallthru
        _
    $region16: #{cross_entropy_loss_2d.1} parent=5 // pred_fallthru
      _
    %p144 = scmp.le.s32.totalorder 1, %s8
    %p145 = scmp.lt.s32.totalorder %s8, 3
    %p146 = pnand %p144, %p145
    %p147 = pneg %p146
    // Predicated region
    $region25: #{cross_entropy_loss_2d.1} parent=5 // pred_check
      _
    $region26: #{cross_entropy_loss_2d.1} parent=5 // pred_check_branch
      %149 = sbr.rel (%p146) target = $region28
    $region27: #{cross_entropy_loss_2d.1} parent=5 // pred_region
      %s150 = ssub.s32 %s8, 1
      %p151 = scmp.lt.s32.totalorder %s17, 1
      %s152 = scalar_select %p151, %s17, 1
      %p153 = scmp.lt.s32.totalorder %s18, 0
      %s154 = scalar_select %p153, %s18, 0
      %s155 = smul.addr %s152, 4
      %s156 = sadd.s32 %s154, %s155
      %s157 = smul.addr %s156, 2
      %s158 = scalar_lea.vmem %s0, %s157
      %p159 = pneg %p48
      %p160 = pneg %p45
      %p161 = scmp.lt.s32.totalorder %s17, 1
      %s162 = scalar_select %p161, %s17, 1
      %p163 = scmp.lt.s32.totalorder %s18, 0
      %s164 = scalar_select %p163, %s18, 0
      %s165 = sadd.s32 %s164, %s162
      %s166 = smul.addr %s165, 2
      %s167 = scalar_lea.vmem %s1, %s166
      %p168 = pneg %p76
      %p169 = pneg %p73
      %p170 = pneg %p104
      %p171 = pneg %p101
      %p172 = scmp.lt.s32.totalorder %s17, 1
      %s173 = scalar_select %p172, %s17, 1
      %p174 = scmp.lt.s32.totalorder %s18, 0
      %s175 = scalar_select %p174, %s18, 0
      %s176 = sadd.s32 %s175, %s173
      %s177 = scalar_lea.vmem %s2, %s176
      %p178 = scmp.lt.s32.totalorder %s17, 1
      %s179 = scalar_select %p178, %s17, 1
      %p180 = scmp.lt.s32.totalorder %s18, 0
      %s181 = scalar_select %p180, %s18, 0
      %s182 = smul.addr %s179, 4
      %s183 = sadd.s32 %s181, %s182
      %s184 = smul.addr %s183, 2
      %s185 = scalar_lea.vmem %s0, %s184
      %p186 = scmp.lt.s32.totalorder %s17, 1
      %s187 = scalar_select %p186, %s17, 1
      %p188 = scmp.lt.s32.totalorder %s18, 0
      %s189 = scalar_select %p188, %s18, 0
      %s190 = sadd.s32 %s189, %s187
      %s191 = smul.addr %s190, 2
      %s192 = scalar_lea.vmem %s1, %s191
      %p193 = scmp.lt.s32.totalorder %s17, 1
      %s194 = scalar_select %p193, %s17, 1
      %p195 = scmp.lt.s32.totalorder %s18, 0
      %s196 = scalar_select %p195, %s18, 0
      %s197 = sadd.s32 %s196, %s194
      %s198 = scalar_lea.vmem %s2, %s197
      %v199 = vld [vmem:[%s185] sm:$0x3]
      %v200 = vld [vmem:[%s185 + $0x2] sm:$0x3]
      %v201 = vld [vmem:[%s185 + $0x4] sm:$0x3]
      %v202 = vld [vmem:[%s185 + $0x6] sm:$0x3]
      %vm203 = vcmask 1041408
      %v204 = vsel %vm203, %v199, -inf
      %v205 = vsel %vm203, %v200, -inf
      %v206 = vsel %vm203, %v201, -inf
      %v207 = vsel %vm203, %v202, -inf
      %v208 = vmax.f32 %v204, %v205
      %v209 = vmax.f32 %v206, %v207
      %v210 = vmax.f32 %v208, %v209
      %v211 = vsub.f32 %v199, %v210
      %v212 = vsub.f32 %v200, %v210
      %v213 = vsub.f32 %v201, %v210
      %v214 = vsub.f32 %v202, %v210
      %v215 = vmul.f32 %v211, 1.442695
      %v216 = vpow.pop %v215
      %v217 = vmul.f32 %v212, 1.442695
      %v218 = vpow.pop %v217
      %v219 = vmul.f32 %v213, 1.442695
      %v220 = vpow.pop %v219
      %v221 = vmul.f32 %v214, 1.442695
      %v222 = vpow.pop %v221
      %v223 = vsel %vm203, %v216, 0.0
      %v224 = vsel %vm203, %v218, 0.0
      %v225 = vadd.f32 %v223, %v224
      %v226 = vsel %vm203, %v220, 0.0
      %v227 = vadd.f32 %v225, %v226
      %v228 = vsel %vm203, %v222, 0.0
      %v229 = vadd.f32 %v227, %v228
      %v230 = vlog2.pop %v229
      %v231 = vmul.f32 %v230, 0.6931472
      %v232 = vlaneseq
      %v233 = vand.u32 %v232, 127
      %v234 = vlaneseq
      %v235 = vshrl.u32 %v234, 7
      %237 = vset.pattern.permute.xlu0 %v235
      %238 = vperm.xlu0 %237, %v233
      %v239 = vpop.permute.xlu0 %238
      %v240 = vperm.slane %v239, 0
      %v241 = vperm.slane %v239, 1
      %v242 = vperm.slane %v239, 2
      %v243 = vperm.slane %v239, 3
      %v244 = vld [vmem:[%s192] sm:$0x3]
      %vm245 = vcmp.eq.s32.totalorder %v240, %v244
      %vm246 = vcmp.eq.s32.totalorder %v241, %v244
      %vm247 = vcmp.eq.s32.totalorder %v242, %v244
      %vm248 = vcmp.eq.s32.totalorder %v243, %v244
      %v249 = vsel %vm245, %v211, 0.0
      %v250 = vsel %vm246, %v212, 0.0
      %v251 = vsel %vm247, %v213, 0.0
      %v252 = vsel %vm248, %v214, 0.0
      %v253 = vsel %vm203, %v249, 0.0
      %v254 = vsel %vm203, %v250, 0.0
      %v255 = vadd.f32 %v253, %v254
      %v256 = vsel %vm203, %v251, 0.0
      %v257 = vadd.f32 %v255, %v256
      %v258 = vsel %vm203, %v252, 0.0
      %v259 = vadd.f32 %v257, %v258
      %v260 = vsub.f32 %v231, %v259
      %v261 = vsel %vm203, %v260, 0.0
      %262 = vadd.xlane.f32.xlu0 %v261
      %v263 = vpop.xlane.xlu0 %262
      %v264 = vrot.slane %v263, 4
      %v265 = vadd.f32 %v263, %v264
      %v266 = vrot.slane %v265, 2
      %v267 = vadd.f32 %v265, %v266
      %v268 = vrot.slane %v267, 1
      %v269 = vadd.f32 %v267, %v268
      %s270 = vtos %v269
      %v271 = vstv %s270
      %272 = vst [vmem:[%s198] sm:$0x1] %v271
      %p273 = scmp.lt.s32.totalorder %s17, 1
      %s274 = scalar_select %p273, %s17, 1
      %p275 = scmp.lt.s32.totalorder %s18, 0
      %s276 = scalar_select %p275, %s18, 0
      %s277 = sadd.s32 %s276, %s274
      %s278 = scalar_lea.vmem %s2, %s277
      // Predicated region
      $region29: #{cross_entropy_loss_2d.1} parent=27 // pred_check
        %p279 = pneg %p101
      $region30: #{cross_entropy_loss_2d.1} parent=27 // pred_check_branch
        %281 = sbr.rel (%p279) target = $region32
      $region31: #{cross_entropy_loss_2d.1} parent=27 // pred_region
        _
      $region32: #{cross_entropy_loss_2d.1} parent=27 // pred_fallthru
        _
    $region28: #{cross_entropy_loss_2d.1} parent=5 // pred_fallthru
      _
    %p282 = scmp.le.s32.totalorder 2, %s8
    // Predicated region
    $region33: #{cross_entropy_loss_2d.1} parent=5 // pred_check
      %p283 = pneg %p282
    $region34: #{cross_entropy_loss_2d.1} parent=5 // pred_check_branch
      %285 = sbr.rel (%p283) target = $region36
    $region35: #{cross_entropy_loss_2d.1} parent=5 // pred_region
      %s286 = ssub.s32 %s8, 2
      // Predicated region
      $region37: #{cross_entropy_loss_2d.1} parent=35 // pred_check
        %p287 = pneg %p107
      $region38: #{cross_entropy_loss_2d.1} parent=35 // pred_check_branch
        %289 = sbr.rel (%p287) target = $region40
      $region39: #{cross_entropy_loss_2d.1} parent=35 // pred_region
        %p290 = scmp.lt.s32.totalorder %s19, 1
        %s291 = scalar_select %p290, %s19, 1
        %p292 = scmp.lt.s32.totalorder %s20, 0
        %s293 = scalar_select %p292, %s20, 0
        %s294 = sadd.s32 %s293, %s291
        %s295 = scalar_lea.vmem %s2, %s294
      $region40: #{cross_entropy_loss_2d.1} parent=35 // pred_fallthru
        _
    $region36: #{cross_entropy_loss_2d.1} parent=5 // pred_fallthru
      _
  $region6: #{cross_entropy_loss_2d.1} parent=0 // loop_footer
    %s12 = sadd.s32 1, %s8
  $region7: #{cross_entropy_loss_2d.1} parent=0 // loop_footer_branch
    %7 = sbr.rel target = $region3
  $region8: #{cross_entropy_loss_2d.1} parent=0 // loop_exit
    _

</llo_original>
